<compile_context>
chip_gen: v7x
topology: tpu7x:2x2x1
jax: 0.10.0
libtpu: 0.0.40
codegen_flags: <defaults>
</compile_context>

<pallas_src>
import functools

import jax
import jax.numpy as jnp
from jax import lax
from jax.experimental import pallas as pl
from jax.experimental.pallas import tpu as pltpu


def _round_up(a, b):
    return (a + b - 1) // b * b


# ----------------------------------------------------------------------------
# Pallas kernels: (bf16 matmul, f32 accumulate) x2 with fused bias + activation.
# Tile layout: x tile (1, C_in*K, TT), output tile (1, C_out, TT)  -> lane dim = time.
# ----------------------------------------------------------------------------
def _encoder_relu_kernel(x_ref, w1_ref, b1_ref, w2_ref, b2_ref, o_ref):
    x = x_ref[0]                                                        # (CK, TT) bf16
    h = jnp.dot(w1_ref[...], x, preferred_element_type=jnp.float32)     # (C_out, TT) f32
    h = jnp.maximum(h + b1_ref[...], 0.0)
    y = jnp.dot(w2_ref[...], h.astype(w2_ref.dtype),
                preferred_element_type=jnp.float32)                     # (C_out, TT) f32
    o_ref[0] = jnp.maximum(y + b2_ref[...], 0.0).astype(o_ref.dtype)


def _encoder_glu_kernel(x_ref, w1_ref, b1_ref, w2a_ref, b2a_ref, w2b_ref, b2b_ref, o_ref):
    x = x_ref[0]                                                        # (CK, TT) bf16
    h = jnp.dot(w1_ref[...], x, preferred_element_type=jnp.float32)
    h = jnp.maximum(h + b1_ref[...], 0.0).astype(w2a_ref.dtype)
    a = jnp.dot(w2a_ref[...], h, preferred_element_type=jnp.float32) + b2a_ref[...]
    g = jnp.dot(w2b_ref[...], h, preferred_element_type=jnp.float32) + b2b_ref[...]
    o_ref[0] = (a * jax.nn.sigmoid(g)).astype(o_ref.dtype)


# ----------------------------------------------------------------------------
# Tile-size heuristic: largest multiple-of-128 time tile that fits a conservative
# VMEM budget (double-buffered input/output tiles + resident weights), capped at 512.
# ----------------------------------------------------------------------------
def _choose_time_tile(t_out, ck, c_hid, c2_rows, c_fin,
                      vmem_budget_bytes=40 * 1024 * 1024):
    weight_bytes = (ck * c_hid + c_hid * c2_rows) * 2 + (c_hid + c2_rows) * 4
    per_col = 2 * (ck * 2) + 2 * (c_fin * 4) + (c_hid + c2_rows) * 4
    avail = max(vmem_budget_bytes - weight_bytes, per_col * 128)
    cap = max(128, (avail // per_col) // 128 * 128)
    return min(512, _round_up(t_out, 128), cap)


# ----------------------------------------------------------------------------
# Wrapper: strided-slice im2col (channels-major), parameter packing, pallas_call.
# ----------------------------------------------------------------------------
@functools.partial(jax.jit, static_argnames=("kernel", "stride", "activation"))
def encoder_forward(x, params, *, kernel, stride, activation="relu"):
    """x: (B, C_in, T) float32 (PyTorch NCT). Returns (B, C_out, T_out) float32."""
    w1, b1, w2, b2 = params["w1"], params["b1"], params["w2"], params["b2"]
    B, c_in, T = x.shape
    c_out = w1.shape[0]
    ck = c_in * kernel
    c2_rows = w2.shape[0]                       # c_out (relu) or 2*c_out (glu)
    t_out = (T - kernel) // stride + 1

    tt = _choose_time_tile(t_out, ck, c_out, c2_rows, c_out)
    t_pad = _round_up(t_out, tt)
    n_t = t_pad // tt

    # im2col -> (B, C_in*K, t_pad), patches[b, c*K + k, t] = x[b, c, t*stride + k]
    # (matches the torch Conv1d weight flattening over (C_in, K)).
    cols = [x[:, :, k:k + (t_out - 1) * stride + 1:stride] for k in range(kernel)]
    xp = jnp.stack(cols, axis=2).reshape(B, ck, t_out)
    if t_pad > t_out:
        xp = jnp.pad(xp, ((0, 0), (0, 0), (0, t_pad - t_out)))
    xp = xp.astype(jnp.bfloat16)

    w1_mat = w1.reshape(c_out, ck).astype(jnp.bfloat16)        # (C_out, CK)
    b1_col = b1.reshape(c_out, 1).astype(jnp.float32)
    w2_mat = w2.reshape(c2_rows, c_out).astype(jnp.bfloat16)   # (c2, C_out)
    b2_col = b2.reshape(c2_rows, 1).astype(jnp.float32)

    def w_spec(r, c):
        return pl.BlockSpec((r, c), lambda b, t: (0, 0))

    x_spec = pl.BlockSpec((1, ck, tt), lambda b, t: (b, 0, t))
    o_spec = pl.BlockSpec((1, c_out, tt), lambda b, t: (b, 0, t))

    cost = pl.CostEstimate(
        flops=2 * B * t_pad * (ck * c_out + c_out * c2_rows),
        transcendentals=(B * t_pad * c_out) if activation == "glu" else 0,
        bytes_accessed=(xp.size * 2 + B * c_out * t_pad * 4
                        + (ck * c_out + c_out * c2_rows) * 2 + (c_out + c2_rows) * 4),
    )
    cparams = pltpu.CompilerParams(
        dimension_semantics=("parallel", "parallel"),
        vmem_limit_bytes=48 * 1024 * 1024,
    )

    if activation == "relu":
        out = pl.pallas_call(
            _encoder_relu_kernel,
            out_shape=jax.ShapeDtypeStruct((B, c_out, t_pad), jnp.float32),
            grid=(B, n_t),
            in_specs=[x_spec,
                      w_spec(c_out, ck), w_spec(c_out, 1),
                      w_spec(c2_rows, c_out), w_spec(c2_rows, 1)],
            out_specs=o_spec,
            compiler_params=cparams,
            cost_estimate=cost,
        )(xp, w1_mat, b1_col, w2_mat, b2_col)
    else:
        # Channel-split GLU (the DEMUCS intent of doubling conv2's channels).
        # TODO(synk): literal nn.GLU() defaults to dim=-1 (time split); channel split used.
        w2a, w2b = w2_mat[:c_out], w2_mat[c_out:]
        b2a, b2b = b2_col[:c_out], b2_col[c_out:]
        out = pl.pallas_call(
            _encoder_glu_kernel,
            out_shape=jax.ShapeDtypeStruct((B, c_out, t_pad), jnp.float32),
            grid=(B, n_t),
            in_specs=[x_spec,
                      w_spec(c_out, ck), w_spec(c_out, 1),
                      w_spec(c_out, c_out), w_spec(c_out, 1),
                      w_spec(c_out, c_out), w_spec(c_out, 1)],
            out_specs=o_spec,
            compiler_params=cparams,
            cost_estimate=cost,
        )(xp, w1_mat, b1_col, w2a, b2a, w2b, b2b)

    # Drop the time padding; output is already NCT (B, C_out, T_out).
    return out[:, :, :t_out]


# ----------------------------------------------------------------------------
# Pure-JAX reference (lax.conv, HIGHEST precision) for correctness checks.
# ----------------------------------------------------------------------------
def encoder_reference(x, params, *, kernel, stride, activation="relu"):
    w1, b1, w2, b2 = params["w1"], params["b1"], params["w2"], params["b2"]
    h = lax.conv_general_dilated(
        x, w1, window_strides=(stride,), padding="VALID",
        dimension_numbers=("NCH", "OIH", "NCH"), precision=lax.Precision.HIGHEST)
    h = jnp.maximum(h + b1[None, :, None], 0.0)
    y = lax.conv_general_dilated(
        h, w2, window_strides=(1,), padding="VALID",
        dimension_numbers=("NCH", "OIH", "NCH"), precision=lax.Precision.HIGHEST)
    y = y + b2[None, :, None]
    if activation == "relu":
        return jnp.maximum(y, 0.0)
    c_out = w1.shape[0]
    a, g = y[:, :c_out, :], y[:, c_out:, :]
    return a * jax.nn.sigmoid(g)


def init_params(key, in_channels, out_channels, kernel, activation="relu"):
    """Deterministic synthetic init mimicking torch Conv1d uniform(-1/sqrt(fan_in), ...)."""
    k1, k2, k3, k4 = jax.random.split(key, 4)
    fan1 = in_channels * kernel
    bound1 = 1.0 / jnp.sqrt(fan1)
    w1 = jax.random.uniform(k1, (out_channels, in_channels, kernel),
                            jnp.float32, -bound1, bound1)
    b1 = jax.random.uniform(k2, (out_channels,), jnp.float32, -bound1, bound1)

    c2_out = out_channels * (2 if activation == "glu" else 1)
    bound2 = 1.0 / jnp.sqrt(out_channels)
    w2 = jax.random.uniform(k3, (c2_out, out_channels, 1),
                            jnp.float32, -bound2, bound2)
    b2 = jax.random.uniform(k4, (c2_out,), jnp.float32, -bound2, bound2)
    return {"w1": w1, "b1": b1, "w2": w2, "b2": b2}


def _bf16_round(a):
    return a.astype(jnp.bfloat16).astype(jnp.float32)


def _check(x, params, *, kernel, stride, activation):
    out = jax.block_until_ready(
        encoder_forward(x, params, kernel=kernel, stride=stride, activation=activation))
    # Reference with matmul inputs pre-rounded to bf16 (mirrors the kernel's MXU inputs);
    # tolerance covers the in-kernel bf16 rounding of the intermediate h.
    p_ref = dict(params)
    p_ref["w1"] = _bf16_round(params["w1"])
    p_ref["w2"] = _bf16_round(params["w2"])
    ref = encoder_reference(_bf16_round(x), p_ref,
                            kernel=kernel, stride=stride, activation=activation)
    B, _, T = x.shape
    t_out = (T - kernel) // stride + 1
    c_out = params["w1"].shape[0]
    assert out.shape == (B, c_out, t_out), out.shape
    assert jnp.allclose(out, ref, atol=2e-2, rtol=2e-2), (
        "mismatch vs reference", float(jnp.max(jnp.abs(out - ref))))


if __name__ == "__main__":
    B, C_IN, C_OUT, K, S = 2, 4, 32, 8, 4
    key = jax.random.PRNGKey(0)
    kx1, kx2, kp1, kp2 = jax.random.split(key, 4)

    # 1) small shape, module-default activation (relu): T=64 -> T_out=15 (single time tile)
    x_small = jax.random.normal(kx1, (B, C_IN, 64), dtype=jnp.float32)
    params_relu = init_params(kp1, C_IN, C_OUT, K, activation="relu")
    _check(x_small, params_relu, kernel=K, stride=S, activation="relu")

    # 2) longer sequence: T=2400 -> T_out=599 (exercises multiple time tiles + padding)
    x_long = jax.random.normal(kx2, (B, C_IN, 2400), dtype=jnp.float32)
    _check(x_long, params_relu, kernel=K, stride=S, activation="relu")

    # 3) GLU activation path (channel-split GLU)
    params_glu = init_params(kp2, C_IN, C_OUT, K, activation="glu")
    _check(x_small, params_glu, kernel=K, stride=S, activation="glu")

    print("KERNEL_OK")
</pallas_src>

<mosaic_0001>
module attributes {stable_mosaic.version = 11 : i64} {
  func.func @_encoder_relu_kernel(%arg0: i32, %arg1: i32, %arg2: memref<1x32x128xbf16, #tpu.memory_space<vmem>>, %arg3: memref<32x32xbf16, #tpu.memory_space<vmem>>, %arg4: memref<32x1xf32, #tpu.memory_space<vmem>>, %arg5: memref<32x32xbf16, #tpu.memory_space<vmem>>, %arg6: memref<32x1xf32, #tpu.memory_space<vmem>>, %arg7: memref<1x32x128xf32, #tpu.memory_space<vmem>>) attributes {dimension_semantics = [#tpu.dimension_semantics<parallel>, #tpu.dimension_semantics<parallel>], iteration_bounds = array<i64: 2, 1>, scalar_prefetch = 0 : i64, scratch_operands = 0 : i64, tpu.core_type = #tpu.core_type<tc>, window_params = [{transform_indices = @transform_0, window_bounds = array<i64: 1, 32, 128>}, {pipeline_mode = #tpu.pipeline_mode<synchronous>, transform_indices = @transform_1, window_bounds = array<i64: 32, 32>}, {pipeline_mode = #tpu.pipeline_mode<synchronous>, transform_indices = @transform_2, window_bounds = array<i64: 32, 1>}, {pipeline_mode = #tpu.pipeline_mode<synchronous>, transform_indices = @transform_3, window_bounds = array<i64: 32, 32>}, {pipeline_mode = #tpu.pipeline_mode<synchronous>, transform_indices = @transform_4, window_bounds = array<i64: 32, 1>}, {transform_indices = @transform_5, window_bounds = array<i64: 1, 32, 128>}]} {
    %c0 = arith.constant 0 : index
    %c0_0 = arith.constant 0 : index
    %c0_1 = arith.constant 0 : index
    %0 = vector.load %arg2[%c0, %c0_0, %c0_1] : memref<1x32x128xbf16, #tpu.memory_space<vmem>>, vector<1x32x128xbf16>
    %1 = vector.shape_cast %0 : vector<1x32x128xbf16> to vector<32x128xbf16>
    %c0_2 = arith.constant 0 : index
    %c0_3 = arith.constant 0 : index
    %2 = vector.load %arg3[%c0_2, %c0_3] : memref<32x32xbf16, #tpu.memory_space<vmem>>, vector<32x32xbf16>
    %cst = arith.constant dense<0.000000e+00> : vector<32x128xf32>
    %3 = tpu.matmul %2, %1, %cst {dimension_numbers = #tpu.dot_dimension_numbers<[1], [0], [0], [1], [0, 0, 1, 1], [], []>} : vector<32x32xbf16>, vector<32x128xbf16>, vector<32x128xf32> -> vector<32x128xf32>
    %c0_4 = arith.constant 0 : index
    %c0_5 = arith.constant 0 : index
    %4 = vector.load %arg4[%c0_4, %c0_5] : memref<32x1xf32, #tpu.memory_space<vmem>>, vector<32x1xf32>
    %5 = vector.broadcast %4 : vector<32x1xf32> to vector<32x128xf32>
    %6 = arith.addf %3, %5 : vector<32x128xf32>
    %cst_6 = arith.constant 0.000000e+00 : f32
    %7 = vector.broadcast %cst_6 : f32 to vector<32x128xf32>
    %8 = arith.maximumf %6, %7 : vector<32x128xf32>
    %c0_7 = arith.constant 0 : index
    %c0_8 = arith.constant 0 : index
    %9 = vector.load %arg5[%c0_7, %c0_8] : memref<32x32xbf16, #tpu.memory_space<vmem>>, vector<32x32xbf16>
    %10 = arith.truncf %8 : vector<32x128xf32> to vector<32x128xbf16>
    %cst_9 = arith.constant dense<0.000000e+00> : vector<32x128xf32>
    %11 = tpu.matmul %9, %10, %cst_9 {dimension_numbers = #tpu.dot_dimension_numbers<[1], [0], [0], [1], [0, 0, 1, 1], [], []>} : vector<32x32xbf16>, vector<32x128xbf16>, vector<32x128xf32> -> vector<32x128xf32>
    %c0_10 = arith.constant 0 : index
    %c0_11 = arith.constant 0 : index
    %12 = vector.load %arg6[%c0_10, %c0_11] : memref<32x1xf32, #tpu.memory_space<vmem>>, vector<32x1xf32>
    %13 = vector.broadcast %12 : vector<32x1xf32> to vector<32x128xf32>
    %14 = arith.addf %11, %13 : vector<32x128xf32>
    %cst_12 = arith.constant 0.000000e+00 : f32
    %15 = vector.broadcast %cst_12 : f32 to vector<32x128xf32>
    %16 = arith.maximumf %14, %15 : vector<32x128xf32>
    %c0_13 = arith.constant 0 : index
    %c0_14 = arith.constant 0 : index
    %c0_15 = arith.constant 0 : index
    %17 = vector.load %arg7[%c0_13, %c0_14, %c0_15] : memref<1x32x128xf32, #tpu.memory_space<vmem>>, vector<1x32x128xf32>
    %18 = vector.shape_cast %17 : vector<1x32x128xf32> to vector<32x128xf32>
    %19 = vector.shape_cast %16 : vector<32x128xf32> to vector<1x32x128xf32>
    tpu.vector_store %arg7[%c0_13, %c0_14, %c0_15], %19 {strides = array<i32>} : memref<1x32x128xf32, #tpu.memory_space<vmem>>, vector<1x32x128xf32>,
    return
  }
  func.func @transform_0(%arg0: i32, %arg1: i32) -> (i32, i32, i32) {
    %c0_i32 = arith.constant 0 : i32
    %c0_i32_0 = arith.constant 0 : i32
    return %arg0, %c0_i32, %arg1 : i32, i32, i32
  }
  func.func @transform_1(%arg0: i32, %arg1: i32) -> (i32, i32) {
    %c0_i32 = arith.constant 0 : i32
    %c0_i32_0 = arith.constant 0 : i32
    %c0_i32_1 = arith.constant 0 : i32
    return %c0_i32, %c0_i32_0 : i32, i32
  }
  func.func @transform_2(%arg0: i32, %arg1: i32) -> (i32, i32) {
    %c0_i32 = arith.constant 0 : i32
    %c0_i32_0 = arith.constant 0 : i32
    %c0_i32_1 = arith.constant 0 : i32
    return %c0_i32, %c0_i32_0 : i32, i32
  }
  func.func @transform_3(%arg0: i32, %arg1: i32) -> (i32, i32) {
    %c0_i32 = arith.constant 0 : i32
    %c0_i32_0 = arith.constant 0 : i32
    %c0_i32_1 = arith.constant 0 : i32
    return %c0_i32, %c0_i32_0 : i32, i32
  }
  func.func @transform_4(%arg0: i32, %arg1: i32) -> (i32, i32) {
    %c0_i32 = arith.constant 0 : i32
    %c0_i32_0 = arith.constant 0 : i32
    %c0_i32_1 = arith.constant 0 : i32
    return %c0_i32, %c0_i32_0 : i32, i32
  }
  func.func @transform_5(%arg0: i32, %arg1: i32) -> (i32, i32, i32) {
    %c0_i32 = arith.constant 0 : i32
    %c0_i32_0 = arith.constant 0 : i32
    return %arg0, %c0_i32, %arg1 : i32, i32, i32
  }
}

</mosaic_0001>

<llo_original>
// kernel: encoder_forward.1
$region0: #{encoder_forward.1}
  #allocation0 [shape = 'u32[]', space=smem, size = 0x4, offset = 0x4, fixed_abs, tag = 'smem constant byte address 0x4 - core index']
  #allocation1 [shape = 'u32[144,128]{1,0:T(1,128)}', space=vmem, size = 0x12000, scoped, tag = 'internal scratch']
  %s0 = inlined_call_operand.vmem [shape: bf16[2,32,128], index: 0, kind: input, shape index: {}]
  %s1 = inlined_call_operand.vmem [shape: bf16[32,32], index: 1, kind: input, shape index: {}]
  %s2 = inlined_call_operand.vmem [shape: f32[32,1], index: 2, kind: input, shape index: {}]
  %s3 = inlined_call_operand.vmem [shape: bf16[32,32], index: 3, kind: input, shape index: {}]
  %s4 = inlined_call_operand.vmem [shape: f32[32,1], index: 4, kind: input, shape index: {}]
  %s5 = inlined_call_operand.vmem [shape: f32[2,32,128], index: 5, kind: output, shape index: {}]
  %s6 = sld [smem:[#allocation0]]
  $region53: #{encoder_forward.1} parent=0
    _
  %s8 = ssub.s32 1, %s6
  %s9 = scalar_select 0, %s8, %s6
  loop: start=0, step=1, limit=4
  $region2: #{encoder_forward.1} parent=0 // loop_pre_header
    _
  $region3: #{encoder_forward.1} parent=0 // loop_header
    %s11 = sphi 0, %s15
    %p12 = scmp.ge.s32.totalorder %s11, 4
    %s18 = sphi 0, %s30
    %s19 = sphi 0, %s26
    %s20 = sphi 0, %s18
    %s21 = sphi 0, %s19
    %s22 = sphi 0, %s20
    %s23 = sphi 0, %s21
    %s35 = sphi 0, %s37
    %s38 = sphi 0, %s35
    %s39 = sphi 0, %s38
    %s55 = sphi 0, %s39
    %s59 = sphi 0, %s59
    %s61 = sphi 0, %s59
    %s62 = sphi 0, %s61
    %s76 = sphi 0, %s62
    %s80 = sphi 0, %s80
    %s82 = sphi 0, %s80
    %s83 = sphi 0, %s82
    %s97 = sphi 0, %s83
    %s101 = sphi 0, %s101
    %s103 = sphi 0, %s101
    %s104 = sphi 0, %s103
    %s118 = sphi 0, %s104
    %s122 = sphi 0, %s122
    %s124 = sphi 0, %s122
    %s125 = sphi 0, %s124
    %s139 = sphi 0, %s125
    %s147 = sphi 0, %s149
    %s150 = sphi 0, %s147
    %s151 = sphi 0, %s150
    %s167 = sphi 0, %s151
  $region4: #{encoder_forward.1} parent=0 // loop_header_branch
    %14 = sbr.rel (%p12) target = $region8
  $region5: #{encoder_forward.1} parent=0 // loop_body
    %s16 = ssub.s32 %s11, 1
    %s17 = ssub.s32 %s11, 2
    %s24 = sadd.s32 1, %s19
    %p25 = scmp.ge.s32.totalorder %s24, 1
    %s26 = scalar_select %p25, 0, %s24
    %s27 = sadd.s32 1, %s18
    %s28 = scalar_select %p25, %s27, %s18
    %p29 = scmp.ge.s32.totalorder %s28, 2
    %s30 = scalar_select %p29, 0, %s28
    %s31 = ssub.s32 %s18, %s30
    %s32 = ssub.s32 %s19, %s26
    %s33 = sor.u32 %s31, %s32
    %p34 = scmp.eq.s32.totalorder %s33, 0
    %s36 = sadd.s32 %s35, 1
    %s37 = scalar_select %p34, %s35, %s36
    %p40 = pneg %p34
    %p41 = scmp.eq.s32.totalorder %s11, 1
    %p42 = por %p40, %p41
    %p43 = scmp.ne.s32.totalorder %s35, %s38
    %p44 = scmp.eq.s32.totalorder %s11, 0
    %p45 = por %p43, %p44
    %p46 = scmp.ne.s32.totalorder %s35, %s38
    %p47 = scmp.eq.s32.totalorder %s16, 1
    %p48 = por %p46, %p47
    %p49 = scmp.ne.s32.totalorder %s38, %s39
    %p50 = scmp.eq.s32.totalorder %s16, 0
    %p51 = por %p49, %p50
    %p52 = scmp.ne.s32.totalorder %s38, %s39
    %p53 = scmp.eq.s32.totalorder %s17, 1
    %p54 = por %p52, %p53
    %p56 = scmp.ne.s32.totalorder %s39, %s55
    %p57 = scmp.eq.s32.totalorder %s17, 0
    %p58 = por %p56, %p57
    %s60 = sadd.s32 %s59, 1
    %p63 = scmp.eq.s32.totalorder %s11, 1
    %p64 = scmp.ne.s32.totalorder %s59, %s61
    %p65 = scmp.eq.s32.totalorder %s11, 0
    %p66 = por %p64, %p65
    %p67 = scmp.ne.s32.totalorder %s59, %s61
    %p68 = scmp.eq.s32.totalorder %s16, 1
    %p69 = por %p67, %p68
    %p70 = scmp.ne.s32.totalorder %s61, %s62
    %p71 = scmp.eq.s32.totalorder %s16, 0
    %p72 = por %p70, %p71
    %p73 = scmp.ne.s32.totalorder %s61, %s62
    %p74 = scmp.eq.s32.totalorder %s17, 1
    %p75 = por %p73, %p74
    %p77 = scmp.ne.s32.totalorder %s62, %s76
    %p78 = scmp.eq.s32.totalorder %s17, 0
    %p79 = por %p77, %p78
    %s81 = sadd.s32 %s80, 1
    %p84 = scmp.eq.s32.totalorder %s11, 1
    %p85 = scmp.ne.s32.totalorder %s80, %s82
    %p86 = scmp.eq.s32.totalorder %s11, 0
    %p87 = por %p85, %p86
    %p88 = scmp.ne.s32.totalorder %s80, %s82
    %p89 = scmp.eq.s32.totalorder %s16, 1
    %p90 = por %p88, %p89
    %p91 = scmp.ne.s32.totalorder %s82, %s83
    %p92 = scmp.eq.s32.totalorder %s16, 0
    %p93 = por %p91, %p92
    %p94 = scmp.ne.s32.totalorder %s82, %s83
    %p95 = scmp.eq.s32.totalorder %s17, 1
    %p96 = por %p94, %p95
    %p98 = scmp.ne.s32.totalorder %s83, %s97
    %p99 = scmp.eq.s32.totalorder %s17, 0
    %p100 = por %p98, %p99
    %s102 = sadd.s32 %s101, 1
    %p105 = scmp.eq.s32.totalorder %s11, 1
    %p106 = scmp.ne.s32.totalorder %s101, %s103
    %p107 = scmp.eq.s32.totalorder %s11, 0
    %p108 = por %p106, %p107
    %p109 = scmp.ne.s32.totalorder %s101, %s103
    %p110 = scmp.eq.s32.totalorder %s16, 1
    %p111 = por %p109, %p110
    %p112 = scmp.ne.s32.totalorder %s103, %s104
    %p113 = scmp.eq.s32.totalorder %s16, 0
    %p114 = por %p112, %p113
    %p115 = scmp.ne.s32.totalorder %s103, %s104
    %p116 = scmp.eq.s32.totalorder %s17, 1
    %p117 = por %p115, %p116
    %p119 = scmp.ne.s32.totalorder %s104, %s118
    %p120 = scmp.eq.s32.totalorder %s17, 0
    %p121 = por %p119, %p120
    %s123 = sadd.s32 %s122, 1
    %p126 = scmp.eq.s32.totalorder %s11, 1
    %p127 = scmp.ne.s32.totalorder %s122, %s124
    %p128 = scmp.eq.s32.totalorder %s11, 0
    %p129 = por %p127, %p128
    %p130 = scmp.ne.s32.totalorder %s122, %s124
    %p131 = scmp.eq.s32.totalorder %s16, 1
    %p132 = por %p130, %p131
    %p133 = scmp.ne.s32.totalorder %s124, %s125
    %p134 = scmp.eq.s32.totalorder %s16, 0
    %p135 = por %p133, %p134
    %p136 = scmp.ne.s32.totalorder %s124, %s125
    %p137 = scmp.eq.s32.totalorder %s17, 1
    %p138 = por %p136, %p137
    %p140 = scmp.ne.s32.totalorder %s125, %s139
    %p141 = scmp.eq.s32.totalorder %s17, 0
    %p142 = por %p140, %p141
    %s143 = ssub.s32 %s18, %s30
    %s144 = ssub.s32 %s19, %s26
    %s145 = sor.u32 %s143, %s144
    %p146 = scmp.eq.s32.totalorder %s145, 0
    %s148 = sadd.s32 %s147, 1
    %s149 = scalar_select %p146, %s147, %s148
    %p152 = pneg %p146
    %p153 = scmp.eq.s32.totalorder %s11, 1
    %p154 = por %p152, %p153
    %p155 = scmp.ne.s32.totalorder %s147, %s150
    %p156 = scmp.eq.s32.totalorder %s11, 0
    %p157 = por %p155, %p156
    %p158 = scmp.ne.s32.totalorder %s147, %s150
    %p159 = scmp.eq.s32.totalorder %s16, 1
    %p160 = por %p158, %p159
    %p161 = scmp.ne.s32.totalorder %s150, %s151
    %p162 = scmp.eq.s32.totalorder %s16, 0
    %p163 = por %p161, %p162
    %p164 = scmp.ne.s32.totalorder %s150, %s151
    %p165 = scmp.eq.s32.totalorder %s17, 1
    %p166 = por %p164, %p165
    %p168 = scmp.ne.s32.totalorder %s151, %s167
    %p169 = scmp.eq.s32.totalorder %s17, 0
    %p170 = por %p168, %p169
    %p171 = scmp.le.s32.totalorder 1, %s11
    %p172 = scmp.lt.s32.totalorder %s11, 3
    %p173 = pnand %p171, %p172
    %p174 = pneg %p173
    // Predicated region
    $region9: #{encoder_forward.1} parent=5 // pred_check
      _
    $region10: #{encoder_forward.1} parent=5 // pred_check_branch
      %176 = sbr.rel (%p173) target = $region12
    $region11: #{encoder_forward.1} parent=5 // pred_region
      %s177 = ssub.s32 %s11, 1
      // Predicated region
      $region13: #{encoder_forward.1} parent=11 // pred_check
        %p178 = pneg %p72
      $region14: #{encoder_forward.1} parent=11 // pred_check_branch
        %180 = sbr.rel (%p178) target = $region16
      $region15: #{encoder_forward.1} parent=11 // pred_region
        _
      $region16: #{encoder_forward.1} parent=11 // pred_fallthru
        _
      // Predicated region
      $region17: #{encoder_forward.1} parent=11 // pred_check
        %p181 = pneg %p93
      $region18: #{encoder_forward.1} parent=11 // pred_check_branch
        %183 = sbr.rel (%p181) target = $region20
      $region19: #{encoder_forward.1} parent=11 // pred_region
        _
      $region20: #{encoder_forward.1} parent=11 // pred_fallthru
        _
      // Predicated region
      $region21: #{encoder_forward.1} parent=11 // pred_check
        %p184 = pneg %p114
      $region22: #{encoder_forward.1} parent=11 // pred_check_branch
        %186 = sbr.rel (%p184) target = $region24
      $region23: #{encoder_forward.1} parent=11 // pred_region
        _
      $region24: #{encoder_forward.1} parent=11 // pred_fallthru
        _
      // Predicated region
      $region25: #{encoder_forward.1} parent=11 // pred_check
        %p187 = pneg %p135
      $region26: #{encoder_forward.1} parent=11 // pred_check_branch
        %189 = sbr.rel (%p187) target = $region28
      $region27: #{encoder_forward.1} parent=11 // pred_region
        _
      $region28: #{encoder_forward.1} parent=11 // pred_fallthru
        _
    $region12: #{encoder_forward.1} parent=5 // pred_fallthru
      _
    %p190 = scmp.lt.s32.totalorder %s11, 2
    // Predicated region
    $region29: #{encoder_forward.1} parent=5 // pred_check
      %p191 = pneg %p190
    $region30: #{encoder_forward.1} parent=5 // pred_check_branch
      %193 = sbr.rel (%p191) target = $region32
    $region31: #{encoder_forward.1} parent=5 // pred_region
      // Predicated region
      $region33: #{encoder_forward.1} parent=31 // pred_check
        %p194 = pneg %p45
      $region34: #{encoder_forward.1} parent=31 // pred_check_branch
        %196 = sbr.rel (%p194) target = $region36
      $region35: #{encoder_forward.1} parent=31 // pred_region
        %p197 = scmp.lt.s32.totalorder %s18, 1
        %s198 = scalar_select %p197, %s18, 1
        %p199 = scmp.lt.s32.totalorder %s19, 0
        %s200 = scalar_select %p199, %s19, 0
        %s201 = smul.addr %s198, 4
        %s202 = sadd.s32 %s200, %s201
        %s203 = smul.addr %s202, 4
        %s204 = scalar_lea.vmem %s0, %s203
      $region36: #{encoder_forward.1} parent=31 // pred_fallthru
        _
    $region32: #{encoder_forward.1} parent=5 // pred_fallthru
      _
    %p205 = scmp.le.s32.totalorder 1, %s11
    %p206 = scmp.lt.s32.totalorder %s11, 3
    %p207 = pnand %p205, %p206
    %p208 = pneg %p207
    // Predicated region
    $region37: #{encoder_forward.1} parent=5 // pred_check
      _
    $region38: #{encoder_forward.1} parent=5 // pred_check_branch
      %210 = sbr.rel (%p207) target = $region40
    $region39: #{encoder_forward.1} parent=5 // pred_region
      %s211 = ssub.s32 %s11, 1
      %p212 = scmp.lt.s32.totalorder %s20, 1
      %s213 = scalar_select %p212, %s20, 1
      %p214 = scmp.lt.s32.totalorder %s21, 0
      %s215 = scalar_select %p214, %s21, 0
      %s216 = smul.addr %s213, 4
      %s217 = sadd.s32 %s215, %s216
      %s218 = smul.addr %s217, 4
      %s219 = scalar_lea.vmem %s0, %s218
      %p220 = pneg %p51
      %p221 = pneg %p48
      %p222 = pneg %p72
      %p223 = pneg %p69
      %p224 = pneg %p93
      %p225 = pneg %p90
      %p226 = pneg %p114
      %p227 = pneg %p111
      %p228 = pneg %p135
      %p229 = pneg %p132
      %p230 = pneg %p163
      %p231 = pneg %p160
      %p232 = scmp.lt.s32.totalorder %s20, 1
      %s233 = scalar_select %p232, %s20, 1
      %p234 = scmp.lt.s32.totalorder %s21, 0
      %s235 = scalar_select %p234, %s21, 0
      %s236 = smul.addr %s233, 4
      %s237 = sadd.s32 %s235, %s236
      %s238 = smul.addr %s237, 8
      %s239 = scalar_lea.vmem %s5, %s238
      %p240 = scmp.lt.s32.totalorder %s20, 1
      %s241 = scalar_select %p240, %s20, 1
      %p242 = scmp.lt.s32.totalorder %s21, 0
      %s243 = scalar_select %p242, %s21, 0
      %s244 = smul.addr %s241, 4
      %s245 = sadd.s32 %s243, %s244
      %s246 = smul.addr %s245, 4
      %s247 = scalar_lea.vmem %s0, %s246
      %p248 = scmp.lt.s32.totalorder %s20, 1
      %s249 = scalar_select %p248, %s20, 1
      %p250 = scmp.lt.s32.totalorder %s21, 0
      %s251 = scalar_select %p250, %s21, 0
      %s252 = smul.addr %s249, 4
      %s253 = sadd.s32 %s251, %s252
      %s254 = smul.addr %s253, 8
      %s255 = scalar_lea.vmem %s5, %s254
      %v257 = vld [vmem:[%s247] sm:$0xf]
      %v258 = vld [vmem:[%s247 + $0x4] sm:$0xf]
      %v259 = vld [vmem:[%s247 + $0x8] sm:$0xf]
      %v260 = vld [vmem:[%s247 + $0xc] sm:$0xf]
      %v261 = vld [vmem:[%s1] sm:$0xf]
      %v262 = vld [vmem:[%s1 + $0x4] sm:$0xf]
      %v263 = vld [vmem:[%s1 + $0x8] sm:$0xf]
      %v264 = vld [vmem:[%s1 + $0xc] sm:$0xf]
      %v265 = vld [vmem:[%s2] sm:$0xff]
      %v266 = vld [vmem:[%s2 + $0x8] sm:$0xff]
      %v267 = vld [vmem:[%s2 + $0x10] sm:$0xff]
      %v268 = vld [vmem:[%s2 + $0x18] sm:$0xff]
      %270 = vset.pattern.permute.xlu0 0
      %271 = vperm.xlu0 %270, %v265
      %v272 = vpop.permute.xlu0 %271
      %275 = vset.pattern.permute.xlu0 0
      %276 = vperm.xlu0 %275, %v266
      %v277 = vpop.permute.xlu0 %276
      %280 = vset.pattern.permute.xlu0 0
      %281 = vperm.xlu0 %280, %v267
      %v282 = vpop.permute.xlu0 %281
      %285 = vset.pattern.permute.xlu0 0
      %286 = vperm.xlu0 %285, %v268
      %v287 = vpop.permute.xlu0 %286
      %v293 = vunpack.c.l.b16 %v261
      %v294 = vunpack.c.l.b16 %v262
      %v295 = vunpack.c.l.b16 %v263
      %v296 = vunpack.c.l.b16 %v264
      %v297 = vpack.c.b16 %v294, %v293
      %v298 = vpack.c.b16 %v296, %v295
      %v303 = vunpack.c.l.b16 %v257
      %v304 = vunpack.c.l.b16 %v258
      %v305 = vunpack.c.l.b16 %v259
      %v306 = vunpack.c.l.b16 %v260
      %v307 = vpack.c.b16 %v304, %v303
      %v308 = vpack.c.b16 %v306, %v305
      %vm311 = vcmask 261120
      %v313 = vsel %vm311, %v297, 0
      %v316 = vsel %vm311, %v298, 0
      %318 = vmatprep.subr.bf16.mxu0 0
      %319 = vmatpush1.bf16.msra.mxu0 %v307
      %320 = vmatprep.subr.bf16.mxu0 0
      %321 = vmatpush1.bf16.msra.mxu0 %v308
      %322 = vmatprep.subr.bf16.mxu0 0
      %323 = vmatpush1.bf16.msra.mxu0 0
      %324 = vmatprep.subr.bf16.mxu0 0
      %325 = vmatpush1.bf16.msra.mxu0 0
      %326 = vmatprep.subr.bf16.mxu0 0
      %327 = vmatpush1.bf16.msra.mxu0 0
      %328 = vmatprep.subr.bf16.mxu0 0
      %329 = vmatpush1.bf16.msra.mxu0 0
      %330 = vmatprep.subr.bf16.mxu0 0
      %331 = vmatpush1.bf16.msra.mxu0 0
      %332 = vmatprep.subr.bf16.mxu0 0
      %333 = vmatpush1.bf16.msra.mxu0 0
      %334 = vmatprep.subr.bf16.mxu0 0
      %335 = vmatpush1.bf16.msra.mxu0 0
      %336 = vmatprep.subr.bf16.mxu0 0
      %337 = vmatpush1.bf16.msra.mxu0 0
      %338 = vmatprep.subr.bf16.mxu0 0
      %339 = vmatpush1.bf16.msra.mxu0 0
      %340 = vmatprep.subr.bf16.mxu0 0
      %341 = vmatpush1.bf16.msra.mxu0 0
      %342 = vmatprep.subr.bf16.mxu0 0
      %343 = vmatpush1.bf16.msra.mxu0 0
      %344 = vmatprep.subr.bf16.mxu0 0
      %345 = vmatpush1.bf16.msra.mxu0 0
      %346 = vmatprep.subr.bf16.mxu0 0
      %347 = vmatpush1.bf16.msra.mxu0 0
      %348 = vmatprep.subr.bf16.mxu0 0
      %349 = vmatpush1.bf16.msra.mxu0 0
      %350 = vmatprep.mubr.bf16.mxu0 0
      %351 = vmatmul.mubr.bf16.gmra.mrb[0].mxu0 %v313
      %v352 = vpop.f32.mrb[0].mxu0
      %v353 = vadd.f32 %v272, %v352
      %v354 = vpop.f32.mrb[0].mxu0
      %v355 = vpop.f32.mrb[0].mxu0
      %v356 = vadd.f32 %v277, %v355
      %v357 = vpop.f32.mrb[0].mxu0
      %358 = vmatprep.mubr.bf16.mxu0 0
      %359 = vmatmul.mubr.bf16.gmra.mrb[0].mxu0 %v316
      %v360 = vpop.f32.mrb[0].mxu0
      %v361 = vadd.f32 %v282, %v360
      %v362 = vpop.f32.mrb[0].mxu0
      %v363 = vpop.f32.mrb[0].mxu0
      %v364 = vadd.f32 %v287, %v363
      %v365 = vpop.f32.mrb[0].mxu0
      %366 = vdwg.mxu0
      %v367 = vmax.f32 %v353, 0.0
      %v368 = vmax.f32 %v356, 0.0
      %v369 = vmax.f32 %v361, 0.0
      %v370 = vmax.f32 %v364, 0.0
      %v371 = vld [vmem:[%s3] sm:$0xf]
      %v372 = vld [vmem:[%s3 + $0x4] sm:$0xf]
      %v373 = vld [vmem:[%s3 + $0x8] sm:$0xf]
      %v374 = vld [vmem:[%s3 + $0xc] sm:$0xf]
      %v375 = vpack.c.bf16 %v368, %v367
      %v376 = vpack.c.bf16 %v370, %v369
      %v377 = vld [vmem:[%s4] sm:$0xff]
      %v378 = vld [vmem:[%s4 + $0x8] sm:$0xff]
      %v379 = vld [vmem:[%s4 + $0x10] sm:$0xff]
      %v380 = vld [vmem:[%s4 + $0x18] sm:$0xff]
      %382 = vset.pattern.permute.xlu0 0
      %383 = vperm.xlu0 %382, %v377
      %v384 = vpop.permute.xlu0 %383
      %387 = vset.pattern.permute.xlu0 0
      %388 = vperm.xlu0 %387, %v378
      %v389 = vpop.permute.xlu0 %388
      %392 = vset.pattern.permute.xlu0 0
      %393 = vperm.xlu0 %392, %v379
      %v394 = vpop.permute.xlu0 %393
      %397 = vset.pattern.permute.xlu0 0
      %398 = vperm.xlu0 %397, %v380
      %v399 = vpop.permute.xlu0 %398
      %v405 = vunpack.c.l.b16 %v371
      %v406 = vunpack.c.l.b16 %v372
      %v407 = vunpack.c.l.b16 %v373
      %v408 = vunpack.c.l.b16 %v374
      %v409 = vpack.c.b16 %v406, %v405
      %v410 = vpack.c.b16 %v408, %v407
      %v412 = vsel %vm311, %v409, 0
      %v415 = vsel %vm311, %v410, 0
      %417 = vmatprep.subr.bf16.mxu0 0
      %418 = vmatpush1.bf16.msra.mxu0 %v375
      %419 = vmatprep.subr.bf16.mxu0 0
      %420 = vmatpush1.bf16.msra.mxu0 %v376
      %421 = vmatprep.subr.bf16.mxu0 0
      %422 = vmatpush1.bf16.msra.mxu0 0
      %423 = vmatprep.subr.bf16.mxu0 0
      %424 = vmatpush1.bf16.msra.mxu0 0
      %425 = vmatprep.subr.bf16.mxu0 0
      %426 = vmatpush1.bf16.msra.mxu0 0
      %427 = vmatprep.subr.bf16.mxu0 0
      %428 = vmatpush1.bf16.msra.mxu0 0
      %429 = vmatprep.subr.bf16.mxu0 0
      %430 = vmatpush1.bf16.msra.mxu0 0
      %431 = vmatprep.subr.bf16.mxu0 0
      %432 = vmatpush1.bf16.msra.mxu0 0
      %433 = vmatprep.subr.bf16.mxu0 0
      %434 = vmatpush1.bf16.msra.mxu0 0
      %435 = vmatprep.subr.bf16.mxu0 0
      %436 = vmatpush1.bf16.msra.mxu0 0
      %437 = vmatprep.subr.bf16.mxu0 0
      %438 = vmatpush1.bf16.msra.mxu0 0
      %439 = vmatprep.subr.bf16.mxu0 0
      %440 = vmatpush1.bf16.msra.mxu0 0
      %441 = vmatprep.subr.bf16.mxu0 0
      %442 = vmatpush1.bf16.msra.mxu0 0
      %443 = vmatprep.subr.bf16.mxu0 0
      %444 = vmatpush1.bf16.msra.mxu0 0
      %445 = vmatprep.subr.bf16.mxu0 0
      %446 = vmatpush1.bf16.msra.mxu0 0
      %447 = vmatprep.subr.bf16.mxu0 0
      %448 = vmatpush1.bf16.msra.mxu0 0
      %449 = vmatprep.mubr.bf16.mxu0 0
      %450 = vmatmul.mubr.bf16.gmra.mrb[0].mxu0 %v412
      %v451 = vpop.f32.mrb[0].mxu0
      %v452 = vadd.f32 %v384, %v451
      %v453 = vpop.f32.mrb[0].mxu0
      %v454 = vpop.f32.mrb[0].mxu0
      %v455 = vadd.f32 %v389, %v454
      %v456 = vpop.f32.mrb[0].mxu0
      %457 = vmatprep.mubr.bf16.mxu0 0
      %458 = vmatmul.mubr.bf16.gmra.mrb[0].mxu0 %v415
      %v459 = vpop.f32.mrb[0].mxu0
      %v460 = vadd.f32 %v394, %v459
      %v461 = vpop.f32.mrb[0].mxu0
      %v462 = vpop.f32.mrb[0].mxu0
      %v463 = vadd.f32 %v399, %v462
      %v464 = vpop.f32.mrb[0].mxu0
      %465 = vdwg.mxu0
      %v466 = vmax.f32 %v452, 0.0
      %v467 = vmax.f32 %v455, 0.0
      %v468 = vmax.f32 %v460, 0.0
      %v469 = vmax.f32 %v463, 0.0
      %470 = vst [vmem:[%s255] sm:$0xff] %v466
      %471 = vst [vmem:[%s255 + $0x8] sm:$0xff] %v467
      %472 = vst [vmem:[%s255 + $0x10] sm:$0xff] %v468
      %473 = vst [vmem:[%s255 + $0x18] sm:$0xff] %v469
      %p474 = scmp.lt.s32.totalorder %s20, 1
      %s475 = scalar_select %p474, %s20, 1
      %p476 = scmp.lt.s32.totalorder %s21, 0
      %s477 = scalar_select %p476, %s21, 0
      %s478 = smul.addr %s475, 4
      %s479 = sadd.s32 %s477, %s478
      %s480 = smul.addr %s479, 8
      %s481 = scalar_lea.vmem %s5, %s480
      // Predicated region
      $region41: #{encoder_forward.1} parent=39 // pred_check
        %p482 = pneg %p160
      $region42: #{encoder_forward.1} parent=39 // pred_check_branch
        %484 = sbr.rel (%p482) target = $region44
      $region43: #{encoder_forward.1} parent=39 // pred_region
        _
      $region44: #{encoder_forward.1} parent=39 // pred_fallthru
        _
    $region40: #{encoder_forward.1} parent=5 // pred_fallthru
      _
    %p485 = scmp.le.s32.totalorder 2, %s11
    // Predicated region
    $region45: #{encoder_forward.1} parent=5 // pred_check
      %p486 = pneg %p485
    $region46: #{encoder_forward.1} parent=5 // pred_check_branch
      %488 = sbr.rel (%p486) target = $region48
    $region47: #{encoder_forward.1} parent=5 // pred_region
      %s489 = ssub.s32 %s11, 2
      // Predicated region
      $region49: #{encoder_forward.1} parent=47 // pred_check
        %p490 = pneg %p166
      $region50: #{encoder_forward.1} parent=47 // pred_check_branch
        %492 = sbr.rel (%p490) target = $region52
      $region51: #{encoder_forward.1} parent=47 // pred_region
        %p493 = scmp.lt.s32.totalorder %s22, 1
        %s494 = scalar_select %p493, %s22, 1
        %p495 = scmp.lt.s32.totalorder %s23, 0
        %s496 = scalar_select %p495, %s23, 0
        %s497 = smul.addr %s494, 4
        %s498 = sadd.s32 %s496, %s497
        %s499 = smul.addr %s498, 8
        %s500 = scalar_lea.vmem %s5, %s499
      $region52: #{encoder_forward.1} parent=47 // pred_fallthru
        _
    $region48: #{encoder_forward.1} parent=5 // pred_fallthru
      _
  $region6: #{encoder_forward.1} parent=0 // loop_footer
    %s15 = sadd.s32 1, %s11
  $region7: #{encoder_forward.1} parent=0 // loop_footer_branch
    %10 = sbr.rel target = $region3
  $region8: #{encoder_forward.1} parent=0 // loop_exit
    _

</llo_original>
